<compile_context>
chip_gen: v5e
topology: v5e:2x2
jax: 0.10.0
libtpu: 0.0.40
codegen_flags: <defaults>
</compile_context>

<pallas_src>
import functools

import jax
import jax.numpy as jnp
from jax import lax
from jax.experimental import pallas as pl
from jax.experimental.pallas import tpu as pltpu


def _round_up(x, m):
    return ((x + m - 1) // m) * m


def _slab_timesteps(seq, bblk):
    """Timesteps per projection slab (~<=512 rows per in-place matmul)."""
    return max(1, min(seq, max(1, 512 // bblk)))


def _rnn_kernel(n_layers, seq, *refs):
    """Multi-layer ReLU RNN + final Linear for one batch chunk.

    refs layout (all padded to 8x128-friendly shapes, one batch chunk):
      proj0_ref                  (seq, bblk, hid_p)  x @ W_ih0^T + b0, time-major
      w_hh0_t                    (hid_p, hid_p)
      [w_ih_t, bias, w_hh_t]     per layer l = 1..n_layers-1
      fc_w_t                     (hid_p, out_p)
      fc_b                       (1, out_p)
      out_ref                    (bblk, out_p)
      buf_ref (scratch)          (seq*bblk, hid_p)
    """
    proj_ref = refs[0]
    n_in = 1 + 1 + 3 * (n_layers - 1) + 2
    fc_w_ref = refs[n_in - 2]
    fc_b_ref = refs[n_in - 1]
    out_ref = refs[n_in]
    buf_ref = refs[n_in + 1]

    bblk = out_ref.shape[0]
    hid = buf_ref.shape[1]
    unroll = True if seq <= 16 else 4

    idx = 1
    h_last = jnp.zeros((bblk, hid), jnp.float32)
    for layer in range(n_layers):
        last_layer = layer == n_layers - 1

        if layer == 0:
            # Input projection for layer 0 was hoisted to the XLA wrapper.
            w_hh_ref = refs[idx]
            idx += 1
        else:
            w_ih_ref, bias_ref, w_hh_ref = refs[idx], refs[idx + 1], refs[idx + 2]
            idx += 3
            w_ih = w_ih_ref[...]
            bias = bias_ref[...]
            # Hoisted input projection for this layer, chunked over seq slabs
            # and done in place on buf (prev layer's outputs -> pre-activations
            # without the recurrent term).  Chunking avoids a second full-size
            # temporary next to buf.
            slab_t = _slab_timesteps(seq, bblk)
            for s0 in range(0, seq, slab_t):
                st = min(slab_t, seq - s0)
                r0, rows = s0 * bblk, st * bblk
                blk = buf_ref[r0:r0 + rows, :]
                buf_ref[r0:r0 + rows, :] = (
                    jnp.dot(blk, w_ih, preferred_element_type=jnp.float32) + bias
                )

        # Keep the full W_hh value resident only while it fits the vreg file.
        w_hh_val = w_hh_ref[...] if hid <= 128 else None

        def step(t, h, layer=layer, last_layer=last_layer,
                 w_hh_ref=w_hh_ref, w_hh_val=w_hh_val):
            w_hh = w_hh_val if w_hh_val is not None else w_hh_ref[...]
            rec = jnp.dot(h, w_hh, preferred_element_type=jnp.float32)
            if layer == 0:
                pre = proj_ref[t] + rec
            else:
                row = pl.multiple_of(t * bblk, bblk)
                pre = buf_ref[pl.ds(row, bblk), :] + rec
            h_new = jnp.maximum(pre, 0.0)
            if not last_layer:
                # Only intermediate layers feed the next layer's projection.
                row = pl.multiple_of(t * bblk, bblk)
                buf_ref[pl.ds(row, bblk), :] = h_new
            return h_new

        h_last = lax.fori_loop(
            0, seq, step, jnp.zeros((bblk, hid), jnp.float32), unroll=unroll
        )

    # Final Linear on the last layer's hidden state at the last timestep
    # (== fc(out)[:, -1, :] in the PyTorch module); (bblk, out_p) is lane-dense.
    out_ref[...] = (
        jnp.dot(h_last, fc_w_ref[...], preferred_element_type=jnp.float32)
        + fc_b_ref[...]
    )


@functools.partial(jax.jit, static_argnums=(2,))
def rnn_forward(x, params, hidden_dim):
    """x: (bs, seq, input_size) float32 (PyTorch batch_first convention)."""
    bs, seq, in_size = x.shape
    n_layers = len(params["w_ih"])
    out_size = params["fc_w"].shape[0]

    # Batch chunking: up to 2 chunks (one per v7x TensorCore), each a multiple
    # of 8 sublanes.  Toy batches (<=8) stay a single chunk.
    n_chunks = 2 if bs > 8 else 1
    bs_p = _round_up(bs, 8 * n_chunks)
    bblk = bs_p // n_chunks
    hid_p = _round_up(hidden_dim, 128)
    out_p = _round_up(out_size, 128)

    # Layer-0 input projection in XLA (no recurrence; input_size << 128 would
    # otherwise waste a full-width MXU pass on zero lanes inside the kernel).
    x32 = x.astype(jnp.float32)
    b0 = params["b_ih"][0] + params["b_hh"][0]
    proj0 = jnp.einsum("bsi,ih->bsh", x32, params["w_ih"][0].T) + b0
    proj0 = jnp.transpose(proj0, (1, 0, 2))                   # (seq, bs, hid)
    proj0 = jnp.pad(
        proj0, ((0, 0), (0, bs_p - bs), (0, hid_p - hidden_dim))
    )                                                          # zero padding

    def full_spec(shape):
        return pl.BlockSpec(shape, lambda b: (0,) * len(shape))

    def pad_hh(l):
        return jnp.pad(
            params["w_hh"][l].T,
            ((0, hid_p - hidden_dim), (0, hid_p - hidden_dim)),
        )

    inputs = [proj0]
    in_specs = [pl.BlockSpec((seq, bblk, hid_p), lambda b: (0, b, 0))]

    inputs.append(pad_hh(0))
    in_specs.append(full_spec((hid_p, hid_p)))
    for l in range(1, n_layers):
        w_ih_t = jnp.pad(
            params["w_ih"][l].T,
            ((0, hid_p - hidden_dim), (0, hid_p - hidden_dim)),
        )
        bias = jnp.pad(
            (params["b_ih"][l] + params["b_hh"][l])[None, :],
            ((0, 0), (0, hid_p - hidden_dim)),
        )
        inputs += [w_ih_t, bias, pad_hh(l)]
        in_specs += [full_spec((hid_p, hid_p)), full_spec((1, hid_p)),
                     full_spec((hid_p, hid_p))]

    fc_w_t = jnp.pad(
        params["fc_w"].T, ((0, hid_p - hidden_dim), (0, out_p - out_size))
    )
    fc_b = jnp.pad(params["fc_b"][None, :], ((0, 0), (0, out_p - out_size)))
    inputs += [fc_w_t, fc_b]
    in_specs += [full_spec((hid_p, out_p)), full_spec((1, out_p))]

    # --- VMEM budget: actual footprint + margin, capped below physical VMEM. --
    f32b = 4
    slab_t = _slab_timesteps(seq, bblk)
    block_bytes = (
        seq * bblk * hid_p                               # proj0 block
        + n_layers * hid_p * hid_p                       # W_hh per layer
        + (n_layers - 1) * (hid_p * hid_p + hid_p)       # W_ih + bias, l >= 1
        + hid_p * out_p + out_p                          # fc weights
        + bblk * out_p                                   # out block
    ) * f32b
    scratch_bytes = (seq * bblk + slab_t * bblk) * hid_p * f32b  # buf + proj temp
    footprint = 2 * block_bytes + scratch_bytes          # x2: pipeline buffers
    try:
        phys_vmem = pltpu.get_tpu_info().vmem_capacity_bytes
    except Exception:
        phys_vmem = 64 * 1024 * 1024                     # v7x-safe assumption
    vmem_limit = int(
        max(4 << 20, min(2 * footprint + (8 << 20), phys_vmem - (8 << 20)))
    )

    kernel = functools.partial(_rnn_kernel, n_layers, seq)
    out_padded = pl.pallas_call(
        kernel,
        out_shape=jax.ShapeDtypeStruct((bs_p, out_p), jnp.float32),
        grid_spec=pltpu.PrefetchScalarGridSpec(
            num_scalar_prefetch=0,
            grid=(n_chunks,),
            in_specs=in_specs,
            out_specs=pl.BlockSpec((bblk, out_p), lambda b: (b, 0)),
            scratch_shapes=[pltpu.VMEM((seq * bblk, hid_p), jnp.float32)],
        ),
        compiler_params=pltpu.CompilerParams(
            dimension_semantics=("parallel",),
            vmem_limit_bytes=vmem_limit,
        ),
    )(*inputs)
    return out_padded[:bs, :out_size]


def rnn_reference(x, params):
    """Pure-JAX reference matching torch.nn.RNN(relu, batch_first) + Linear."""
    bs, seq, _ = x.shape
    n_layers = len(params["w_ih"])
    inp = x
    for l in range(n_layers):
        w_ih, w_hh = params["w_ih"][l], params["w_hh"][l]
        b_ih, b_hh = params["b_ih"][l], params["b_hh"][l]
        h = jnp.zeros((bs, w_hh.shape[0]), jnp.float32)
        outs = []
        for t in range(seq):
            h = jax.nn.relu(inp[:, t, :] @ w_ih.T + b_ih + h @ w_hh.T + b_hh)
            outs.append(h)
        inp = jnp.stack(outs, axis=1)
    return inp[:, -1, :] @ params["fc_w"].T + params["fc_b"]


def init_params(key, input_size, hidden_dim, output_size, n_layers):
    """Deterministic init matching PyTorch's U(-1/sqrt(H), 1/sqrt(H)) scheme."""
    k = 1.0 / jnp.sqrt(jnp.float32(hidden_dim))
    params = {"w_ih": [], "w_hh": [], "b_ih": [], "b_hh": []}
    for l in range(n_layers):
        in_l = input_size if l == 0 else hidden_dim
        key, k1, k2, k3, k4 = jax.random.split(key, 5)
        params["w_ih"].append(
            jax.random.uniform(k1, (hidden_dim, in_l), jnp.float32, -k, k))
        params["w_hh"].append(
            jax.random.uniform(k2, (hidden_dim, hidden_dim), jnp.float32, -k, k))
        params["b_ih"].append(
            jax.random.uniform(k3, (hidden_dim,), jnp.float32, -k, k))
        params["b_hh"].append(
            jax.random.uniform(k4, (hidden_dim,), jnp.float32, -k, k))
    key, k5, k6 = jax.random.split(key, 3)
    params["fc_w"] = jax.random.uniform(
        k5, (output_size, hidden_dim), jnp.float32, -k, k)
    params["fc_b"] = jax.random.uniform(
        k6, (output_size,), jnp.float32, -k, k)
    return params


if __name__ == "__main__":
    input_size = 4
    hidden_dim = 32
    output_size = 4
    n_layers = 2
    bs, seq = 2, 8

    key = jax.random.PRNGKey(0)
    key, xkey, pkey = jax.random.split(key, 3)
    x = jax.random.normal(xkey, (bs, seq, input_size), jnp.float32)
    params = init_params(pkey, input_size, hidden_dim, output_size, n_layers)

    out = rnn_forward(x, params, hidden_dim)
    out = jax.block_until_ready(out)

    ref = rnn_reference(x, params)
    assert out.shape == (bs, output_size), out.shape
    assert jnp.allclose(out, ref, atol=1e-4, rtol=1e-4), (
        f"max abs err = {jnp.max(jnp.abs(out - ref))}")

    print("KERNEL_OK")
</pallas_src>

<mosaic_0001>
module attributes {stable_mosaic.version = 11 : i64} {
  func.func @_rnn_kernel(%arg0: i32, %arg1: memref<8x8x128xf32, #tpu.memory_space<vmem>>, %arg2: memref<128x128xf32, #tpu.memory_space<vmem>>, %arg3: memref<128x128xf32, #tpu.memory_space<vmem>>, %arg4: memref<1x128xf32, #tpu.memory_space<vmem>>, %arg5: memref<128x128xf32, #tpu.memory_space<vmem>>, %arg6: memref<128x128xf32, #tpu.memory_space<vmem>>, %arg7: memref<1x128xf32, #tpu.memory_space<vmem>>, %arg8: memref<8x128xf32, #tpu.memory_space<vmem>>, %arg9: memref<64x128xf32, #tpu.memory_space<vmem>>) attributes {dimension_semantics = [#tpu.dimension_semantics<parallel>], iteration_bounds = array<i64: 1>, scalar_prefetch = 0 : i64, scratch_operands = 1 : i64, tpu.core_type = #tpu.core_type<tc>, window_params = [{transform_indices = @transform_0, window_bounds = array<i64: 8, 8, 128>}, {pipeline_mode = #tpu.pipeline_mode<synchronous>, transform_indices = @transform_1, window_bounds = array<i64: 128, 128>}, {pipeline_mode = #tpu.pipeline_mode<synchronous>, transform_indices = @transform_2, window_bounds = array<i64: 128, 128>}, {pipeline_mode = #tpu.pipeline_mode<synchronous>, transform_indices = @transform_3, window_bounds = array<i64: 1, 128>}, {pipeline_mode = #tpu.pipeline_mode<synchronous>, transform_indices = @transform_4, window_bounds = array<i64: 128, 128>}, {pipeline_mode = #tpu.pipeline_mode<synchronous>, transform_indices = @transform_5, window_bounds = array<i64: 128, 128>}, {pipeline_mode = #tpu.pipeline_mode<synchronous>, transform_indices = @transform_6, window_bounds = array<i64: 1, 128>}, {transform_indices = @transform_7, window_bounds = array<i64: 8, 128>}]} {
    %c0 = arith.constant 0 : index
    %c0_0 = arith.constant 0 : index
    %0 = vector.load %arg2[%c0, %c0_0] : memref<128x128xf32, #tpu.memory_space<vmem>>, vector<128x128xf32>
    %cst = arith.constant 0.000000e+00 : f32
    %1 = vector.broadcast %cst : f32 to vector<8x128xf32>
    %c0_i32 = arith.constant 0 : i32
    %cst_1 = arith.constant dense<0.000000e+00> : vector<8x128xf32>
    %2 = tpu.matmul %1, %0, %cst_1 {dimension_numbers = #tpu.dot_dimension_numbers<[1], [0], [0], [1], [0, 0, 1, 1], [], []>} : vector<8x128xf32>, vector<128x128xf32>, vector<8x128xf32> -> vector<8x128xf32>
    %3 = arith.index_cast %c0_i32 : i32 to index
    %c0_2 = arith.constant 0 : index
    %c0_3 = arith.constant 0 : index
    %4 = vector.load %arg1[%3, %c0_2, %c0_3] : memref<8x8x128xf32, #tpu.memory_space<vmem>>, vector<1x8x128xf32>
    %5 = vector.shape_cast %4 : vector<1x8x128xf32> to vector<8x128xf32>
    %6 = arith.addf %5, %2 : vector<8x128xf32>
    %cst_4 = arith.constant 0.000000e+00 : f32
    %7 = vector.broadcast %cst_4 : f32 to vector<8x128xf32>
    %8 = arith.maximumf %6, %7 : vector<8x128xf32>
    %c8_i32 = arith.constant 8 : i32
    %9 = arith.muli %c0_i32, %c8_i32 : i32
    %10 = tpu.assume_multiple %9, 8 : i32
    %11 = arith.index_cast %10 : i32 to index
    %c0_5 = arith.constant 0 : index
    %12 = vector.load %arg9[%11, %c0_5] : memref<64x128xf32, #tpu.memory_space<vmem>>, vector<8x128xf32>
    tpu.vector_store %arg9[%11, %c0_5], %8 {strides = array<i32>} : memref<64x128xf32, #tpu.memory_space<vmem>>, vector<8x128xf32>,
    %c1_i32 = arith.constant 1 : i32
    %cst_6 = arith.constant dense<0.000000e+00> : vector<8x128xf32>
    %13 = tpu.matmul %8, %0, %cst_6 {dimension_numbers = #tpu.dot_dimension_numbers<[1], [0], [0], [1], [0, 0, 1, 1], [], []>} : vector<8x128xf32>, vector<128x128xf32>, vector<8x128xf32> -> vector<8x128xf32>
    %14 = arith.index_cast %c1_i32 : i32 to index
    %c0_7 = arith.constant 0 : index
    %c0_8 = arith.constant 0 : index
    %15 = vector.load %arg1[%14, %c0_7, %c0_8] : memref<8x8x128xf32, #tpu.memory_space<vmem>>, vector<1x8x128xf32>
    %16 = vector.shape_cast %15 : vector<1x8x128xf32> to vector<8x128xf32>
    %17 = arith.addf %16, %13 : vector<8x128xf32>
    %cst_9 = arith.constant 0.000000e+00 : f32
    %18 = vector.broadcast %cst_9 : f32 to vector<8x128xf32>
    %19 = arith.maximumf %17, %18 : vector<8x128xf32>
    %c8_i32_10 = arith.constant 8 : i32
    %20 = arith.muli %c1_i32, %c8_i32_10 : i32
    %21 = tpu.assume_multiple %20, 8 : i32
    %22 = arith.index_cast %21 : i32 to index
    %c0_11 = arith.constant 0 : index
    %23 = vector.load %arg9[%22, %c0_11] : memref<64x128xf32, #tpu.memory_space<vmem>>, vector<8x128xf32>
    tpu.vector_store %arg9[%22, %c0_11], %19 {strides = array<i32>} : memref<64x128xf32, #tpu.memory_space<vmem>>, vector<8x128xf32>,
    %c2_i32 = arith.constant 2 : i32
    %cst_12 = arith.constant dense<0.000000e+00> : vector<8x128xf32>
    %24 = tpu.matmul %19, %0, %cst_12 {dimension_numbers = #tpu.dot_dimension_numbers<[1], [0], [0], [1], [0, 0, 1, 1], [], []>} : vector<8x128xf32>, vector<128x128xf32>, vector<8x128xf32> -> vector<8x128xf32>
    %25 = arith.index_cast %c2_i32 : i32 to index
    %c0_13 = arith.constant 0 : index
    %c0_14 = arith.constant 0 : index
    %26 = vector.load %arg1[%25, %c0_13, %c0_14] : memref<8x8x128xf32, #tpu.memory_space<vmem>>, vector<1x8x128xf32>
    %27 = vector.shape_cast %26 : vector<1x8x128xf32> to vector<8x128xf32>
    %28 = arith.addf %27, %24 : vector<8x128xf32>
    %cst_15 = arith.constant 0.000000e+00 : f32
    %29 = vector.broadcast %cst_15 : f32 to vector<8x128xf32>
    %30 = arith.maximumf %28, %29 : vector<8x128xf32>
    %c8_i32_16 = arith.constant 8 : i32
    %31 = arith.muli %c2_i32, %c8_i32_16 : i32
    %32 = tpu.assume_multiple %31, 8 : i32
    %33 = arith.index_cast %32 : i32 to index
    %c0_17 = arith.constant 0 : index
    %34 = vector.load %arg9[%33, %c0_17] : memref<64x128xf32, #tpu.memory_space<vmem>>, vector<8x128xf32>
    tpu.vector_store %arg9[%33, %c0_17], %30 {strides = array<i32>} : memref<64x128xf32, #tpu.memory_space<vmem>>, vector<8x128xf32>,
    %c3_i32 = arith.constant 3 : i32
    %cst_18 = arith.constant dense<0.000000e+00> : vector<8x128xf32>
    %35 = tpu.matmul %30, %0, %cst_18 {dimension_numbers = #tpu.dot_dimension_numbers<[1], [0], [0], [1], [0, 0, 1, 1], [], []>} : vector<8x128xf32>, vector<128x128xf32>, vector<8x128xf32> -> vector<8x128xf32>
    %36 = arith.index_cast %c3_i32 : i32 to index
    %c0_19 = arith.constant 0 : index
    %c0_20 = arith.constant 0 : index
    %37 = vector.load %arg1[%36, %c0_19, %c0_20] : memref<8x8x128xf32, #tpu.memory_space<vmem>>, vector<1x8x128xf32>
    %38 = vector.shape_cast %37 : vector<1x8x128xf32> to vector<8x128xf32>
    %39 = arith.addf %38, %35 : vector<8x128xf32>
    %cst_21 = arith.constant 0.000000e+00 : f32
    %40 = vector.broadcast %cst_21 : f32 to vector<8x128xf32>
    %41 = arith.maximumf %39, %40 : vector<8x128xf32>
    %c8_i32_22 = arith.constant 8 : i32
    %42 = arith.muli %c3_i32, %c8_i32_22 : i32
    %43 = tpu.assume_multiple %42, 8 : i32
    %44 = arith.index_cast %43 : i32 to index
    %c0_23 = arith.constant 0 : index
    %45 = vector.load %arg9[%44, %c0_23] : memref<64x128xf32, #tpu.memory_space<vmem>>, vector<8x128xf32>
    tpu.vector_store %arg9[%44, %c0_23], %41 {strides = array<i32>} : memref<64x128xf32, #tpu.memory_space<vmem>>, vector<8x128xf32>,
    %c4_i32 = arith.constant 4 : i32
    %cst_24 = arith.constant dense<0.000000e+00> : vector<8x128xf32>
    %46 = tpu.matmul %41, %0, %cst_24 {dimension_numbers = #tpu.dot_dimension_numbers<[1], [0], [0], [1], [0, 0, 1, 1], [], []>} : vector<8x128xf32>, vector<128x128xf32>, vector<8x128xf32> -> vector<8x128xf32>
    %47 = arith.index_cast %c4_i32 : i32 to index
    %c0_25 = arith.constant 0 : index
    %c0_26 = arith.constant 0 : index
    %48 = vector.load %arg1[%47, %c0_25, %c0_26] : memref<8x8x128xf32, #tpu.memory_space<vmem>>, vector<1x8x128xf32>
    %49 = vector.shape_cast %48 : vector<1x8x128xf32> to vector<8x128xf32>
    %50 = arith.addf %49, %46 : vector<8x128xf32>
    %cst_27 = arith.constant 0.000000e+00 : f32
    %51 = vector.broadcast %cst_27 : f32 to vector<8x128xf32>
    %52 = arith.maximumf %50, %51 : vector<8x128xf32>
    %c8_i32_28 = arith.constant 8 : i32
    %53 = arith.muli %c4_i32, %c8_i32_28 : i32
    %54 = tpu.assume_multiple %53, 8 : i32
    %55 = arith.index_cast %54 : i32 to index
    %c0_29 = arith.constant 0 : index
    %56 = vector.load %arg9[%55, %c0_29] : memref<64x128xf32, #tpu.memory_space<vmem>>, vector<8x128xf32>
    tpu.vector_store %arg9[%55, %c0_29], %52 {strides = array<i32>} : memref<64x128xf32, #tpu.memory_space<vmem>>, vector<8x128xf32>,
    %c5_i32 = arith.constant 5 : i32
    %cst_30 = arith.constant dense<0.000000e+00> : vector<8x128xf32>
    %57 = tpu.matmul %52, %0, %cst_30 {dimension_numbers = #tpu.dot_dimension_numbers<[1], [0], [0], [1], [0, 0, 1, 1], [], []>} : vector<8x128xf32>, vector<128x128xf32>, vector<8x128xf32> -> vector<8x128xf32>
    %58 = arith.index_cast %c5_i32 : i32 to index
    %c0_31 = arith.constant 0 : index
    %c0_32 = arith.constant 0 : index
    %59 = vector.load %arg1[%58, %c0_31, %c0_32] : memref<8x8x128xf32, #tpu.memory_space<vmem>>, vector<1x8x128xf32>
    %60 = vector.shape_cast %59 : vector<1x8x128xf32> to vector<8x128xf32>
    %61 = arith.addf %60, %57 : vector<8x128xf32>
    %cst_33 = arith.constant 0.000000e+00 : f32
    %62 = vector.broadcast %cst_33 : f32 to vector<8x128xf32>
    %63 = arith.maximumf %61, %62 : vector<8x128xf32>
    %c8_i32_34 = arith.constant 8 : i32
    %64 = arith.muli %c5_i32, %c8_i32_34 : i32
    %65 = tpu.assume_multiple %64, 8 : i32
    %66 = arith.index_cast %65 : i32 to index
    %c0_35 = arith.constant 0 : index
    %67 = vector.load %arg9[%66, %c0_35] : memref<64x128xf32, #tpu.memory_space<vmem>>, vector<8x128xf32>
    tpu.vector_store %arg9[%66, %c0_35], %63 {strides = array<i32>} : memref<64x128xf32, #tpu.memory_space<vmem>>, vector<8x128xf32>,
    %c6_i32 = arith.constant 6 : i32
    %cst_36 = arith.constant dense<0.000000e+00> : vector<8x128xf32>
    %68 = tpu.matmul %63, %0, %cst_36 {dimension_numbers = #tpu.dot_dimension_numbers<[1], [0], [0], [1], [0, 0, 1, 1], [], []>} : vector<8x128xf32>, vector<128x128xf32>, vector<8x128xf32> -> vector<8x128xf32>
    %69 = arith.index_cast %c6_i32 : i32 to index
    %c0_37 = arith.constant 0 : index
    %c0_38 = arith.constant 0 : index
    %70 = vector.load %arg1[%69, %c0_37, %c0_38] : memref<8x8x128xf32, #tpu.memory_space<vmem>>, vector<1x8x128xf32>
    %71 = vector.shape_cast %70 : vector<1x8x128xf32> to vector<8x128xf32>
    %72 = arith.addf %71, %68 : vector<8x128xf32>
    %cst_39 = arith.constant 0.000000e+00 : f32
    %73 = vector.broadcast %cst_39 : f32 to vector<8x128xf32>
    %74 = arith.maximumf %72, %73 : vector<8x128xf32>
    %c8_i32_40 = arith.constant 8 : i32
    %75 = arith.muli %c6_i32, %c8_i32_40 : i32
    %76 = tpu.assume_multiple %75, 8 : i32
    %77 = arith.index_cast %76 : i32 to index
    %c0_41 = arith.constant 0 : index
    %78 = vector.load %arg9[%77, %c0_41] : memref<64x128xf32, #tpu.memory_space<vmem>>, vector<8x128xf32>
    tpu.vector_store %arg9[%77, %c0_41], %74 {strides = array<i32>} : memref<64x128xf32, #tpu.memory_space<vmem>>, vector<8x128xf32>,
    %c7_i32 = arith.constant 7 : i32
    %cst_42 = arith.constant dense<0.000000e+00> : vector<8x128xf32>
    %79 = tpu.matmul %74, %0, %cst_42 {dimension_numbers = #tpu.dot_dimension_numbers<[1], [0], [0], [1], [0, 0, 1, 1], [], []>} : vector<8x128xf32>, vector<128x128xf32>, vector<8x128xf32> -> vector<8x128xf32>
    %80 = arith.index_cast %c7_i32 : i32 to index
    %c0_43 = arith.constant 0 : index
    %c0_44 = arith.constant 0 : index
    %81 = vector.load %arg1[%80, %c0_43, %c0_44] : memref<8x8x128xf32, #tpu.memory_space<vmem>>, vector<1x8x128xf32>
    %82 = vector.shape_cast %81 : vector<1x8x128xf32> to vector<8x128xf32>
    %83 = arith.addf %82, %79 : vector<8x128xf32>
    %cst_45 = arith.constant 0.000000e+00 : f32
    %84 = vector.broadcast %cst_45 : f32 to vector<8x128xf32>
    %85 = arith.maximumf %83, %84 : vector<8x128xf32>
    %c8_i32_46 = arith.constant 8 : i32
    %86 = arith.muli %c7_i32, %c8_i32_46 : i32
    %87 = tpu.assume_multiple %86, 8 : i32
    %88 = arith.index_cast %87 : i32 to index
    %c0_47 = arith.constant 0 : index
    %89 = vector.load %arg9[%88, %c0_47] : memref<64x128xf32, #tpu.memory_space<vmem>>, vector<8x128xf32>
    tpu.vector_store %arg9[%88, %c0_47], %85 {strides = array<i32>} : memref<64x128xf32, #tpu.memory_space<vmem>>, vector<8x128xf32>,
    %c8_i32_48 = arith.constant 8 : i32
    %c0_49 = arith.constant 0 : index
    %c0_50 = arith.constant 0 : index
    %90 = vector.load %arg3[%c0_49, %c0_50] : memref<128x128xf32, #tpu.memory_space<vmem>>, vector<128x128xf32>
    %c0_51 = arith.constant 0 : index
    %c0_52 = arith.constant 0 : index
    %91 = vector.load %arg4[%c0_51, %c0_52] : memref<1x128xf32, #tpu.memory_space<vmem>>, vector<1x128xf32>
    %c0_53 = arith.constant 0 : index
    %c0_54 = arith.constant 0 : index
    %92 = vector.load %arg9[%c0_53, %c0_54] : memref<64x128xf32, #tpu.memory_space<vmem>>, vector<64x128xf32>
    %cst_55 = arith.constant dense<0.000000e+00> : vector<64x128xf32>
    %93 = tpu.matmul %92, %90, %cst_55 {dimension_numbers = #tpu.dot_dimension_numbers<[1], [0], [0], [1], [0, 0, 1, 1], [], []>} : vector<64x128xf32>, vector<128x128xf32>, vector<64x128xf32> -> vector<64x128xf32>
    %94 = vector.broadcast %91 : vector<1x128xf32> to vector<64x128xf32>
    %95 = arith.addf %93, %94 : vector<64x128xf32>
    %c0_56 = arith.constant 0 : index
    %c0_57 = arith.constant 0 : index
    %96 = vector.load %arg9[%c0_56, %c0_57] : memref<64x128xf32, #tpu.memory_space<vmem>>, vector<64x128xf32>
    tpu.vector_store %arg9[%c0_56, %c0_57], %95 {strides = array<i32>} : memref<64x128xf32, #tpu.memory_space<vmem>>, vector<64x128xf32>,
    %c0_58 = arith.constant 0 : index
    %c0_59 = arith.constant 0 : index
    %97 = vector.load %arg5[%c0_58, %c0_59] : memref<128x128xf32, #tpu.memory_space<vmem>>, vector<128x128xf32>
    %cst_60 = arith.constant 0.000000e+00 : f32
    %98 = vector.broadcast %cst_60 : f32 to vector<8x128xf32>
    %c0_i32_61 = arith.constant 0 : i32
    %cst_62 = arith.constant dense<0.000000e+00> : vector<8x128xf32>
    %99 = tpu.matmul %98, %97, %cst_62 {dimension_numbers = #tpu.dot_dimension_numbers<[1], [0], [0], [1], [0, 0, 1, 1], [], []>} : vector<8x128xf32>, vector<128x128xf32>, vector<8x128xf32> -> vector<8x128xf32>
    %c8_i32_63 = arith.constant 8 : i32
    %100 = arith.muli %c0_i32_61, %c8_i32_63 : i32
    %101 = tpu.assume_multiple %100, 8 : i32
    %102 = arith.index_cast %101 : i32 to index
    %c0_64 = arith.constant 0 : index
    %103 = vector.load %arg9[%102, %c0_64] : memref<64x128xf32, #tpu.memory_space<vmem>>, vector<8x128xf32>
    %104 = arith.addf %103, %99 : vector<8x128xf32>
    %cst_65 = arith.constant 0.000000e+00 : f32
    %105 = vector.broadcast %cst_65 : f32 to vector<8x128xf32>
    %106 = arith.maximumf %104, %105 : vector<8x128xf32>
    %c1_i32_66 = arith.constant 1 : i32
    %cst_67 = arith.constant dense<0.000000e+00> : vector<8x128xf32>
    %107 = tpu.matmul %106, %97, %cst_67 {dimension_numbers = #tpu.dot_dimension_numbers<[1], [0], [0], [1], [0, 0, 1, 1], [], []>} : vector<8x128xf32>, vector<128x128xf32>, vector<8x128xf32> -> vector<8x128xf32>
    %c8_i32_68 = arith.constant 8 : i32
    %108 = arith.muli %c1_i32_66, %c8_i32_68 : i32
    %109 = tpu.assume_multiple %108, 8 : i32
    %110 = arith.index_cast %109 : i32 to index
    %c0_69 = arith.constant 0 : index
    %111 = vector.load %arg9[%110, %c0_69] : memref<64x128xf32, #tpu.memory_space<vmem>>, vector<8x128xf32>
    %112 = arith.addf %111, %107 : vector<8x128xf32>
    %cst_70 = arith.constant 0.000000e+00 : f32
    %113 = vector.broadcast %cst_70 : f32 to vector<8x128xf32>
    %114 = arith.maximumf %112, %113 : vector<8x128xf32>
    %c2_i32_71 = arith.constant 2 : i32
    %cst_72 = arith.constant dense<0.000000e+00> : vector<8x128xf32>
    %115 = tpu.matmul %114, %97, %cst_72 {dimension_numbers = #tpu.dot_dimension_numbers<[1], [0], [0], [1], [0, 0, 1, 1], [], []>} : vector<8x128xf32>, vector<128x128xf32>, vector<8x128xf32> -> vector<8x128xf32>
    %c8_i32_73 = arith.constant 8 : i32
    %116 = arith.muli %c2_i32_71, %c8_i32_73 : i32
    %117 = tpu.assume_multiple %116, 8 : i32
    %118 = arith.index_cast %117 : i32 to index
    %c0_74 = arith.constant 0 : index
    %119 = vector.load %arg9[%118, %c0_74] : memref<64x128xf32, #tpu.memory_space<vmem>>, vector<8x128xf32>
    %120 = arith.addf %119, %115 : vector<8x128xf32>
    %cst_75 = arith.constant 0.000000e+00 : f32
    %121 = vector.broadcast %cst_75 : f32 to vector<8x128xf32>
    %122 = arith.maximumf %120, %121 : vector<8x128xf32>
    %c3_i32_76 = arith.constant 3 : i32
    %cst_77 = arith.constant dense<0.000000e+00> : vector<8x128xf32>
    %123 = tpu.matmul %122, %97, %cst_77 {dimension_numbers = #tpu.dot_dimension_numbers<[1], [0], [0], [1], [0, 0, 1, 1], [], []>} : vector<8x128xf32>, vector<128x128xf32>, vector<8x128xf32> -> vector<8x128xf32>
    %c8_i32_78 = arith.constant 8 : i32
    %124 = arith.muli %c3_i32_76, %c8_i32_78 : i32
    %125 = tpu.assume_multiple %124, 8 : i32
    %126 = arith.index_cast %125 : i32 to index
    %c0_79 = arith.constant 0 : index
    %127 = vector.load %arg9[%126, %c0_79] : memref<64x128xf32, #tpu.memory_space<vmem>>, vector<8x128xf32>
    %128 = arith.addf %127, %123 : vector<8x128xf32>
    %cst_80 = arith.constant 0.000000e+00 : f32
    %129 = vector.broadcast %cst_80 : f32 to vector<8x128xf32>
    %130 = arith.maximumf %128, %129 : vector<8x128xf32>
    %c4_i32_81 = arith.constant 4 : i32
    %cst_82 = arith.constant dense<0.000000e+00> : vector<8x128xf32>
    %131 = tpu.matmul %130, %97, %cst_82 {dimension_numbers = #tpu.dot_dimension_numbers<[1], [0], [0], [1], [0, 0, 1, 1], [], []>} : vector<8x128xf32>, vector<128x128xf32>, vector<8x128xf32> -> vector<8x128xf32>
    %c8_i32_83 = arith.constant 8 : i32
    %132 = arith.muli %c4_i32_81, %c8_i32_83 : i32
    %133 = tpu.assume_multiple %132, 8 : i32
    %134 = arith.index_cast %133 : i32 to index
    %c0_84 = arith.constant 0 : index
    %135 = vector.load %arg9[%134, %c0_84] : memref<64x128xf32, #tpu.memory_space<vmem>>, vector<8x128xf32>
    %136 = arith.addf %135, %131 : vector<8x128xf32>
    %cst_85 = arith.constant 0.000000e+00 : f32
    %137 = vector.broadcast %cst_85 : f32 to vector<8x128xf32>
    %138 = arith.maximumf %136, %137 : vector<8x128xf32>
    %c5_i32_86 = arith.constant 5 : i32
    %cst_87 = arith.constant dense<0.000000e+00> : vector<8x128xf32>
    %139 = tpu.matmul %138, %97, %cst_87 {dimension_numbers = #tpu.dot_dimension_numbers<[1], [0], [0], [1], [0, 0, 1, 1], [], []>} : vector<8x128xf32>, vector<128x128xf32>, vector<8x128xf32> -> vector<8x128xf32>
    %c8_i32_88 = arith.constant 8 : i32
    %140 = arith.muli %c5_i32_86, %c8_i32_88 : i32
    %141 = tpu.assume_multiple %140, 8 : i32
    %142 = arith.index_cast %141 : i32 to index
    %c0_89 = arith.constant 0 : index
    %143 = vector.load %arg9[%142, %c0_89] : memref<64x128xf32, #tpu.memory_space<vmem>>, vector<8x128xf32>
    %144 = arith.addf %143, %139 : vector<8x128xf32>
    %cst_90 = arith.constant 0.000000e+00 : f32
    %145 = vector.broadcast %cst_90 : f32 to vector<8x128xf32>
    %146 = arith.maximumf %144, %145 : vector<8x128xf32>
    %c6_i32_91 = arith.constant 6 : i32
    %cst_92 = arith.constant dense<0.000000e+00> : vector<8x128xf32>
    %147 = tpu.matmul %146, %97, %cst_92 {dimension_numbers = #tpu.dot_dimension_numbers<[1], [0], [0], [1], [0, 0, 1, 1], [], []>} : vector<8x128xf32>, vector<128x128xf32>, vector<8x128xf32> -> vector<8x128xf32>
    %c8_i32_93 = arith.constant 8 : i32
    %148 = arith.muli %c6_i32_91, %c8_i32_93 : i32
    %149 = tpu.assume_multiple %148, 8 : i32
    %150 = arith.index_cast %149 : i32 to index
    %c0_94 = arith.constant 0 : index
    %151 = vector.load %arg9[%150, %c0_94] : memref<64x128xf32, #tpu.memory_space<vmem>>, vector<8x128xf32>
    %152 = arith.addf %151, %147 : vector<8x128xf32>
    %cst_95 = arith.constant 0.000000e+00 : f32
    %153 = vector.broadcast %cst_95 : f32 to vector<8x128xf32>
    %154 = arith.maximumf %152, %153 : vector<8x128xf32>
    %c7_i32_96 = arith.constant 7 : i32
    %cst_97 = arith.constant dense<0.000000e+00> : vector<8x128xf32>
    %155 = tpu.matmul %154, %97, %cst_97 {dimension_numbers = #tpu.dot_dimension_numbers<[1], [0], [0], [1], [0, 0, 1, 1], [], []>} : vector<8x128xf32>, vector<128x128xf32>, vector<8x128xf32> -> vector<8x128xf32>
    %c8_i32_98 = arith.constant 8 : i32
    %156 = arith.muli %c7_i32_96, %c8_i32_98 : i32
    %157 = tpu.assume_multiple %156, 8 : i32
    %158 = arith.index_cast %157 : i32 to index
    %c0_99 = arith.constant 0 : index
    %159 = vector.load %arg9[%158, %c0_99] : memref<64x128xf32, #tpu.memory_space<vmem>>, vector<8x128xf32>
    %160 = arith.addf %159, %155 : vector<8x128xf32>
    %cst_100 = arith.constant 0.000000e+00 : f32
    %161 = vector.broadcast %cst_100 : f32 to vector<8x128xf32>
    %162 = arith.maximumf %160, %161 : vector<8x128xf32>
    %c8_i32_101 = arith.constant 8 : i32
    %c0_102 = arith.constant 0 : index
    %c0_103 = arith.constant 0 : index
    %163 = vector.load %arg6[%c0_102, %c0_103] : memref<128x128xf32, #tpu.memory_space<vmem>>, vector<128x128xf32>
    %cst_104 = arith.constant dense<0.000000e+00> : vector<8x128xf32>
    %164 = tpu.matmul %162, %163, %cst_104 {dimension_numbers = #tpu.dot_dimension_numbers<[1], [0], [0], [1], [0, 0, 1, 1], [], []>} : vector<8x128xf32>, vector<128x128xf32>, vector<8x128xf32> -> vector<8x128xf32>
    %c0_105 = arith.constant 0 : index
    %c0_106 = arith.constant 0 : index
    %165 = vector.load %arg7[%c0_105, %c0_106] : memref<1x128xf32, #tpu.memory_space<vmem>>, vector<1x128xf32>
    %166 = vector.broadcast %165 : vector<1x128xf32> to vector<8x128xf32>
    %167 = arith.addf %164, %166 : vector<8x128xf32>
    %c0_107 = arith.constant 0 : index
    %c0_108 = arith.constant 0 : index
    %168 = vector.load %arg8[%c0_107, %c0_108] : memref<8x128xf32, #tpu.memory_space<vmem>>, vector<8x128xf32>
    tpu.vector_store %arg8[%c0_107, %c0_108], %167 {strides = array<i32>} : memref<8x128xf32, #tpu.memory_space<vmem>>, vector<8x128xf32>,
    return
  }
  func.func @transform_0(%arg0: i32) -> (i32, i32, i32) {
    %c0_i32 = arith.constant 0 : i32
    %c0_i32_0 = arith.constant 0 : i32
    %c0_i32_1 = arith.constant 0 : i32
    return %c0_i32, %arg0, %c0_i32_0 : i32, i32, i32
  }
  func.func @transform_1(%arg0: i32) -> (i32, i32) {
    %c0_i32 = arith.constant 0 : i32
    %c0_i32_0 = arith.constant 0 : i32
    %c0_i32_1 = arith.constant 0 : i32
    return %c0_i32, %c0_i32_0 : i32, i32
  }
  func.func @transform_2(%arg0: i32) -> (i32, i32) {
    %c0_i32 = arith.constant 0 : i32
    %c0_i32_0 = arith.constant 0 : i32
    %c0_i32_1 = arith.constant 0 : i32
    return %c0_i32, %c0_i32_0 : i32, i32
  }
  func.func @transform_3(%arg0: i32) -> (i32, i32) {
    %c0_i32 = arith.constant 0 : i32
    %c0_i32_0 = arith.constant 0 : i32
    %c0_i32_1 = arith.constant 0 : i32
    return %c0_i32, %c0_i32_0 : i32, i32
  }
  func.func @transform_4(%arg0: i32) -> (i32, i32) {
    %c0_i32 = arith.constant 0 : i32
    %c0_i32_0 = arith.constant 0 : i32
    %c0_i32_1 = arith.constant 0 : i32
    return %c0_i32, %c0_i32_0 : i32, i32
  }
  func.func @transform_5(%arg0: i32) -> (i32, i32) {
    %c0_i32 = arith.constant 0 : i32
    %c0_i32_0 = arith.constant 0 : i32
    %c0_i32_1 = arith.constant 0 : i32
    return %c0_i32, %c0_i32_0 : i32, i32
  }
  func.func @transform_6(%arg0: i32) -> (i32, i32) {
    %c0_i32 = arith.constant 0 : i32
    %c0_i32_0 = arith.constant 0 : i32
    %c0_i32_1 = arith.constant 0 : i32
    return %c0_i32, %c0_i32_0 : i32, i32
  }
  func.func @transform_7(%arg0: i32) -> (i32, i32) {
    %c0_i32 = arith.constant 0 : i32
    %c0_i32_0 = arith.constant 0 : i32
    return %arg0, %c0_i32 : i32, i32
  }
}

</mosaic_0001>

<llo_original>
// kernel: rnn_forward.1
$region0: #{rnn_forward.1}
  #allocation0 [shape = 'u32[]', space=smem, size = 0x4, offset = 0x4, fixed_abs, tag = 'smem constant byte address 0x4 - core index']
  #allocation1 [shape = 'u32[72,128]{1,0:T(1,128)}', space=vmem, size = 0x9000, scoped, tag = 'internal scratch']
  #allocation2 [shape = 'f32[64,128]{1,0:T(8,128)}', space=vmem, size = 0x8000, scoped, tag = 'scratch operand']
  %s0 = inlined_call_operand.vmem [shape: f32[8,8,128], index: 0, kind: input, shape index: {}]
  %s1 = inlined_call_operand.vmem [shape: f32[128,128], index: 1, kind: input, shape index: {}]
  %s2 = inlined_call_operand.vmem [shape: f32[128,128], index: 2, kind: input, shape index: {}]
  %s3 = inlined_call_operand.vmem [shape: f32[1,128], index: 3, kind: input, shape index: {}]
  %s4 = inlined_call_operand.vmem [shape: f32[128,128], index: 4, kind: input, shape index: {}]
  %s5 = inlined_call_operand.vmem [shape: f32[128,128], index: 5, kind: input, shape index: {}]
  %s6 = inlined_call_operand.vmem [shape: f32[1,128], index: 6, kind: input, shape index: {}]
  %s7 = inlined_call_operand.vmem [shape: f32[8,128], index: 7, kind: output, shape index: {}]
  %s8 = sld [smem:[#allocation0]]
  $region38: #{rnn_forward.1} parent=0
    _
  %s10 = ssub.s32 1, %s8
  %s11 = scalar_select 0, %s10, %s8
  // Predicated region
  $region2: #{rnn_forward.1} parent=0 // pred_check
    _
  $region3: #{rnn_forward.1} parent=0 // pred_check_branch
    %13 = sbr.rel (0) target = $region5
  $region4: #{rnn_forward.1} parent=0 // pred_region
    _
  $region5: #{rnn_forward.1} parent=0 // pred_fallthru
    _
  // Predicated region
  $region6: #{rnn_forward.1} parent=0 // pred_check
    _
  $region7: #{rnn_forward.1} parent=0 // pred_check_branch
    %15 = sbr.rel (0) target = $region9
  $region8: #{rnn_forward.1} parent=0 // pred_region
    _
  $region9: #{rnn_forward.1} parent=0 // pred_fallthru
    _
  // Predicated region
  $region10: #{rnn_forward.1} parent=0 // pred_check
    _
  $region11: #{rnn_forward.1} parent=0 // pred_check_branch
    %17 = sbr.rel (0) target = $region13
  $region12: #{rnn_forward.1} parent=0 // pred_region
    _
  $region13: #{rnn_forward.1} parent=0 // pred_fallthru
    _
  // Predicated region
  $region14: #{rnn_forward.1} parent=0 // pred_check
    _
  $region15: #{rnn_forward.1} parent=0 // pred_check_branch
    %19 = sbr.rel (0) target = $region17
  $region16: #{rnn_forward.1} parent=0 // pred_region
    _
  $region17: #{rnn_forward.1} parent=0 // pred_fallthru
    _
  // Predicated region
  $region18: #{rnn_forward.1} parent=0 // pred_check
    _
  $region19: #{rnn_forward.1} parent=0 // pred_check_branch
    %21 = sbr.rel (0) target = $region21
  $region20: #{rnn_forward.1} parent=0 // pred_region
    _
  $region21: #{rnn_forward.1} parent=0 // pred_fallthru
    _
  // Predicated region
  $region22: #{rnn_forward.1} parent=0 // pred_check
    _
  $region23: #{rnn_forward.1} parent=0 // pred_check_branch
    %23 = sbr.rel (0) target = $region25
  $region24: #{rnn_forward.1} parent=0 // pred_region
    _
  $region25: #{rnn_forward.1} parent=0 // pred_fallthru
    _
  // Predicated region
  $region26: #{rnn_forward.1} parent=0 // pred_check
    _
  $region27: #{rnn_forward.1} parent=0 // pred_check_branch
    %25 = sbr.rel (0) target = $region29
  $region28: #{rnn_forward.1} parent=0 // pred_region
    _
  $region29: #{rnn_forward.1} parent=0 // pred_fallthru
    _
  %v26 = vld [vmem:[%s1] sm:$0xff]
  %v27 = vld [vmem:[%s1 + $0x8] sm:$0xff]
  %v28 = vld [vmem:[%s1 + $0x10] sm:$0xff]
  %v29 = vld [vmem:[%s1 + $0x18] sm:$0xff]
  %v30 = vld [vmem:[%s1 + $0x20] sm:$0xff]
  %v31 = vld [vmem:[%s1 + $0x28] sm:$0xff]
  %v32 = vld [vmem:[%s1 + $0x30] sm:$0xff]
  %v33 = vld [vmem:[%s1 + $0x38] sm:$0xff]
  %v34 = vld [vmem:[%s1 + $0x40] sm:$0xff]
  %v35 = vld [vmem:[%s1 + $0x48] sm:$0xff]
  %v36 = vld [vmem:[%s1 + $0x50] sm:$0xff]
  %v37 = vld [vmem:[%s1 + $0x58] sm:$0xff]
  %v38 = vld [vmem:[%s1 + $0x60] sm:$0xff]
  %v39 = vld [vmem:[%s1 + $0x68] sm:$0xff]
  %v40 = vld [vmem:[%s1 + $0x70] sm:$0xff]
  %v41 = vld [vmem:[%s1 + $0x78] sm:$0xff]
  %42 = vmatpush.msra.mxu0 %v41
  %43 = vmatpush.msra.mxu0 %v40
  %44 = vmatpush.msra.mxu0 %v39
  %45 = vmatpush.msra.mxu0 %v38
  %46 = vmatpush.msra.mxu0 %v37
  %47 = vmatpush.msra.mxu0 %v36
  %48 = vmatpush.msra.mxu0 %v35
  %49 = vmatpush.msra.mxu0 %v34
  %50 = vmatpush.msra.mxu0 %v33
  %51 = vmatpush.msra.mxu0 %v32
  %52 = vmatpush.msra.mxu0 %v31
  %53 = vmatpush.msra.mxu0 %v30
  %54 = vmatpush.msra.mxu0 %v29
  %55 = vmatpush.msra.mxu0 %v28
  %56 = vmatpush.msra.mxu0 %v27
  %57 = vmatpush.msra.mxu0 %v26
  %58 = vmatmul.f32.gmra.mxu0 0.0
  %v59 = vpop.f32.mrf.mxu0
  %v60 = vadd.f32 0.0, %v59
  %61 = vdwg.mxu0
  %v62 = vld [vmem:[%s0] sm:$0xff]
  %v63 = vadd.f32 %v62, %v60
  %v64 = vmax.f32 %v63, 0.0
  %65 = vst [vmem:[#allocation2] sm:$0xff] %v64
  %66 = vmatpush.msra.mxu0 %v41
  %67 = vmatpush.msra.mxu0 %v40
  %68 = vmatpush.msra.mxu0 %v39
  %69 = vmatpush.msra.mxu0 %v38
  %70 = vmatpush.msra.mxu0 %v37
  %71 = vmatpush.msra.mxu0 %v36
  %72 = vmatpush.msra.mxu0 %v35
  %73 = vmatpush.msra.mxu0 %v34
  %74 = vmatpush.msra.mxu0 %v33
  %75 = vmatpush.msra.mxu0 %v32
  %76 = vmatpush.msra.mxu0 %v31
  %77 = vmatpush.msra.mxu0 %v30
  %78 = vmatpush.msra.mxu0 %v29
  %79 = vmatpush.msra.mxu0 %v28
  %80 = vmatpush.msra.mxu0 %v27
  %81 = vmatpush.msra.mxu0 %v26
  %82 = vmatmul.f32.gmra.mxu0 %v64
  %v83 = vpop.f32.mrf.mxu0
  %v84 = vadd.f32 0.0, %v83
  %85 = vdwg.mxu0
  %s86 = scalar_lea.vmem %s0, 8
  %v87 = vld [vmem:[%s86] sm:$0xff]
  %v88 = vadd.f32 %v87, %v84
  %v89 = vmax.f32 %v88, 0.0
  %s90 = scalar_lea.vmem [#allocation2], 8
  %91 = vst [vmem:[%s90] sm:$0xff] %v89
  %92 = vmatpush.msra.mxu0 %v41
  %93 = vmatpush.msra.mxu0 %v40
  %94 = vmatpush.msra.mxu0 %v39
  %95 = vmatpush.msra.mxu0 %v38
  %96 = vmatpush.msra.mxu0 %v37
  %97 = vmatpush.msra.mxu0 %v36
  %98 = vmatpush.msra.mxu0 %v35
  %99 = vmatpush.msra.mxu0 %v34
  %100 = vmatpush.msra.mxu0 %v33
  %101 = vmatpush.msra.mxu0 %v32
  %102 = vmatpush.msra.mxu0 %v31
  %103 = vmatpush.msra.mxu0 %v30
  %104 = vmatpush.msra.mxu0 %v29
  %105 = vmatpush.msra.mxu0 %v28
  %106 = vmatpush.msra.mxu0 %v27
  %107 = vmatpush.msra.mxu0 %v26
  %108 = vmatmul.f32.gmra.mxu0 %v89
  %v109 = vpop.f32.mrf.mxu0
  %v110 = vadd.f32 0.0, %v109
  %111 = vdwg.mxu0
  %s112 = scalar_lea.vmem %s0, 16
  %v113 = vld [vmem:[%s112] sm:$0xff]
  %v114 = vadd.f32 %v113, %v110
  %v115 = vmax.f32 %v114, 0.0
  %s116 = scalar_lea.vmem [#allocation2], 16
  %117 = vst [vmem:[%s116] sm:$0xff] %v115
  %118 = vmatpush.msra.mxu0 %v41
  %119 = vmatpush.msra.mxu0 %v40
  %120 = vmatpush.msra.mxu0 %v39
  %121 = vmatpush.msra.mxu0 %v38
  %122 = vmatpush.msra.mxu0 %v37
  %123 = vmatpush.msra.mxu0 %v36
  %124 = vmatpush.msra.mxu0 %v35
  %125 = vmatpush.msra.mxu0 %v34
  %126 = vmatpush.msra.mxu0 %v33
  %127 = vmatpush.msra.mxu0 %v32
  %128 = vmatpush.msra.mxu0 %v31
  %129 = vmatpush.msra.mxu0 %v30
  %130 = vmatpush.msra.mxu0 %v29
  %131 = vmatpush.msra.mxu0 %v28
  %132 = vmatpush.msra.mxu0 %v27
  %133 = vmatpush.msra.mxu0 %v26
  %134 = vmatmul.f32.gmra.mxu0 %v115
  %v135 = vpop.f32.mrf.mxu0
  %v136 = vadd.f32 0.0, %v135
  %137 = vdwg.mxu0
  %s138 = scalar_lea.vmem %s0, 24
  %v139 = vld [vmem:[%s138] sm:$0xff]
  %v140 = vadd.f32 %v139, %v136
  %v141 = vmax.f32 %v140, 0.0
  %s142 = scalar_lea.vmem [#allocation2], 24
  %143 = vst [vmem:[%s142] sm:$0xff] %v141
  %144 = vmatpush.msra.mxu0 %v41
  %145 = vmatpush.msra.mxu0 %v40
  %146 = vmatpush.msra.mxu0 %v39
  %147 = vmatpush.msra.mxu0 %v38
  %148 = vmatpush.msra.mxu0 %v37
  %149 = vmatpush.msra.mxu0 %v36
  %150 = vmatpush.msra.mxu0 %v35
  %151 = vmatpush.msra.mxu0 %v34
  %152 = vmatpush.msra.mxu0 %v33
  %153 = vmatpush.msra.mxu0 %v32
  %154 = vmatpush.msra.mxu0 %v31
  %155 = vmatpush.msra.mxu0 %v30
  %156 = vmatpush.msra.mxu0 %v29
  %157 = vmatpush.msra.mxu0 %v28
  %158 = vmatpush.msra.mxu0 %v27
  %159 = vmatpush.msra.mxu0 %v26
  %160 = vmatmul.f32.gmra.mxu0 %v141
  %v161 = vpop.f32.mrf.mxu0
  %v162 = vadd.f32 0.0, %v161
  %163 = vdwg.mxu0
  %s164 = scalar_lea.vmem %s0, 32
  %v165 = vld [vmem:[%s164] sm:$0xff]
  %v166 = vadd.f32 %v165, %v162
  %v167 = vmax.f32 %v166, 0.0
  %s168 = scalar_lea.vmem [#allocation2], 32
  %169 = vst [vmem:[%s168] sm:$0xff] %v167
  %170 = vmatpush.msra.mxu0 %v41
  %171 = vmatpush.msra.mxu0 %v40
  %172 = vmatpush.msra.mxu0 %v39
  %173 = vmatpush.msra.mxu0 %v38
  %174 = vmatpush.msra.mxu0 %v37
  %175 = vmatpush.msra.mxu0 %v36
  %176 = vmatpush.msra.mxu0 %v35
  %177 = vmatpush.msra.mxu0 %v34
  %178 = vmatpush.msra.mxu0 %v33
  %179 = vmatpush.msra.mxu0 %v32
  %180 = vmatpush.msra.mxu0 %v31
  %181 = vmatpush.msra.mxu0 %v30
  %182 = vmatpush.msra.mxu0 %v29
  %183 = vmatpush.msra.mxu0 %v28
  %184 = vmatpush.msra.mxu0 %v27
  %185 = vmatpush.msra.mxu0 %v26
  %186 = vmatmul.f32.gmra.mxu0 %v167
  %v187 = vpop.f32.mrf.mxu0
  %v188 = vadd.f32 0.0, %v187
  %189 = vdwg.mxu0
  %s190 = scalar_lea.vmem %s0, 40
  %v191 = vld [vmem:[%s190] sm:$0xff]
  %v192 = vadd.f32 %v191, %v188
  %v193 = vmax.f32 %v192, 0.0
  %s194 = scalar_lea.vmem [#allocation2], 40
  %195 = vst [vmem:[%s194] sm:$0xff] %v193
  %196 = vmatpush.msra.mxu0 %v41
  %197 = vmatpush.msra.mxu0 %v40
  %198 = vmatpush.msra.mxu0 %v39
  %199 = vmatpush.msra.mxu0 %v38
  %200 = vmatpush.msra.mxu0 %v37
  %201 = vmatpush.msra.mxu0 %v36
  %202 = vmatpush.msra.mxu0 %v35
  %203 = vmatpush.msra.mxu0 %v34
  %204 = vmatpush.msra.mxu0 %v33
  %205 = vmatpush.msra.mxu0 %v32
  %206 = vmatpush.msra.mxu0 %v31
  %207 = vmatpush.msra.mxu0 %v30
  %208 = vmatpush.msra.mxu0 %v29
  %209 = vmatpush.msra.mxu0 %v28
  %210 = vmatpush.msra.mxu0 %v27
  %211 = vmatpush.msra.mxu0 %v26
  %212 = vmatmul.f32.gmra.mxu0 %v193
  %v213 = vpop.f32.mrf.mxu0
  %v214 = vadd.f32 0.0, %v213
  %215 = vdwg.mxu0
  %s216 = scalar_lea.vmem %s0, 48
  %v217 = vld [vmem:[%s216] sm:$0xff]
  %v218 = vadd.f32 %v217, %v214
  %v219 = vmax.f32 %v218, 0.0
  %s220 = scalar_lea.vmem [#allocation2], 48
  %221 = vst [vmem:[%s220] sm:$0xff] %v219
  %222 = vmatpush.msra.mxu0 %v41
  %223 = vmatpush.msra.mxu0 %v40
  %224 = vmatpush.msra.mxu0 %v39
  %225 = vmatpush.msra.mxu0 %v38
  %226 = vmatpush.msra.mxu0 %v37
  %227 = vmatpush.msra.mxu0 %v36
  %228 = vmatpush.msra.mxu0 %v35
  %229 = vmatpush.msra.mxu0 %v34
  %230 = vmatpush.msra.mxu0 %v33
  %231 = vmatpush.msra.mxu0 %v32
  %232 = vmatpush.msra.mxu0 %v31
  %233 = vmatpush.msra.mxu0 %v30
  %234 = vmatpush.msra.mxu0 %v29
  %235 = vmatpush.msra.mxu0 %v28
  %236 = vmatpush.msra.mxu0 %v27
  %237 = vmatpush.msra.mxu0 %v26
  %238 = vmatmul.f32.gmra.mxu0 %v219
  %v239 = vpop.f32.mrf.mxu0
  %v240 = vadd.f32 0.0, %v239
  %241 = vdwg.mxu0
  %s242 = scalar_lea.vmem %s0, 56
  %v243 = vld [vmem:[%s242] sm:$0xff]
  %v244 = vadd.f32 %v243, %v240
  %v245 = vmax.f32 %v244, 0.0
  %s246 = scalar_lea.vmem [#allocation2], 56
  %247 = vst [vmem:[%s246] sm:$0xff] %v245
  %v248 = vld [vmem:[%s2] sm:$0xff]
  %v249 = vld [vmem:[%s2 + $0x8] sm:$0xff]
  %v250 = vld [vmem:[%s2 + $0x10] sm:$0xff]
  %v251 = vld [vmem:[%s2 + $0x18] sm:$0xff]
  %v252 = vld [vmem:[%s2 + $0x20] sm:$0xff]
  %v253 = vld [vmem:[%s2 + $0x28] sm:$0xff]
  %v254 = vld [vmem:[%s2 + $0x30] sm:$0xff]
  %v255 = vld [vmem:[%s2 + $0x38] sm:$0xff]
  %v256 = vld [vmem:[%s2 + $0x40] sm:$0xff]
  %v257 = vld [vmem:[%s2 + $0x48] sm:$0xff]
  %v258 = vld [vmem:[%s2 + $0x50] sm:$0xff]
  %v259 = vld [vmem:[%s2 + $0x58] sm:$0xff]
  %v260 = vld [vmem:[%s2 + $0x60] sm:$0xff]
  %v261 = vld [vmem:[%s2 + $0x68] sm:$0xff]
  %v262 = vld [vmem:[%s2 + $0x70] sm:$0xff]
  %v263 = vld [vmem:[%s2 + $0x78] sm:$0xff]
  %v264 = vld [vmem:[%s3] sm:$0x1]
  %v265 = vld [vmem:[#allocation2] sm:$0xff]
  %v266 = vld [vmem:[#allocation2 + $0x8] sm:$0xff]
  %v267 = vld [vmem:[#allocation2 + $0x10] sm:$0xff]
  %v268 = vld [vmem:[#allocation2 + $0x18] sm:$0xff]
  %v269 = vld [vmem:[#allocation2 + $0x20] sm:$0xff]
  %v270 = vld [vmem:[#allocation2 + $0x28] sm:$0xff]
  %v271 = vld [vmem:[#allocation2 + $0x30] sm:$0xff]
  %v272 = vld [vmem:[#allocation2 + $0x38] sm:$0xff]
  %v274 = vperm.slane %v264, 0
  %276 = vmatpush.msra.mxu0 %v263
  %277 = vmatpush.msra.mxu0 %v262
  %278 = vmatpush.msra.mxu0 %v261
  %279 = vmatpush.msra.mxu0 %v260
  %280 = vmatpush.msra.mxu0 %v259
  %281 = vmatpush.msra.mxu0 %v258
  %282 = vmatpush.msra.mxu0 %v257
  %283 = vmatpush.msra.mxu0 %v256
  %284 = vmatpush.msra.mxu0 %v255
  %285 = vmatpush.msra.mxu0 %v254
  %286 = vmatpush.msra.mxu0 %v253
  %287 = vmatpush.msra.mxu0 %v252
  %288 = vmatpush.msra.mxu0 %v251
  %289 = vmatpush.msra.mxu0 %v250
  %290 = vmatpush.msra.mxu0 %v249
  %291 = vmatpush.msra.mxu0 %v248
  %292 = vmatmul.f32.gmra.mxu0 %v265
  %v293 = vpop.f32.mrf.mxu0
  %v294 = vadd.f32 %v274, %v293
  %295 = vmatmul.f32.gmra.mxu0 %v266
  %v296 = vpop.f32.mrf.mxu0
  %v297 = vadd.f32 %v274, %v296
  %298 = vmatmul.f32.gmra.mxu0 %v267
  %v299 = vpop.f32.mrf.mxu0
  %v300 = vadd.f32 %v274, %v299
  %301 = vmatmul.f32.gmra.mxu0 %v268
  %v302 = vpop.f32.mrf.mxu0
  %v303 = vadd.f32 %v274, %v302
  %304 = vmatmul.f32.gmra.mxu0 %v269
  %v305 = vpop.f32.mrf.mxu0
  %v306 = vadd.f32 %v274, %v305
  %307 = vmatmul.f32.gmra.mxu0 %v270
  %v308 = vpop.f32.mrf.mxu0
  %v309 = vadd.f32 %v274, %v308
  %310 = vmatmul.f32.gmra.mxu0 %v271
  %v311 = vpop.f32.mrf.mxu0
  %v312 = vadd.f32 %v274, %v311
  %313 = vmatmul.f32.gmra.mxu0 %v272
  %v314 = vpop.f32.mrf.mxu0
  %v315 = vadd.f32 %v274, %v314
  %316 = vdwg.mxu0
  %317 = vst [vmem:[#allocation2] sm:$0xff] %v294
  %318 = vst [vmem:[#allocation2 + $0x8] sm:$0xff] %v297
  %319 = vst [vmem:[#allocation2 + $0x10] sm:$0xff] %v300
  %320 = vst [vmem:[#allocation2 + $0x18] sm:$0xff] %v303
  %321 = vst [vmem:[#allocation2 + $0x20] sm:$0xff] %v306
  %322 = vst [vmem:[#allocation2 + $0x28] sm:$0xff] %v309
  %323 = vst [vmem:[#allocation2 + $0x30] sm:$0xff] %v312
  %324 = vst [vmem:[#allocation2 + $0x38] sm:$0xff] %v315
  %v325 = vld [vmem:[%s4] sm:$0xff]
  %v326 = vld [vmem:[%s4 + $0x8] sm:$0xff]
  %v327 = vld [vmem:[%s4 + $0x10] sm:$0xff]
  %v328 = vld [vmem:[%s4 + $0x18] sm:$0xff]
  %v329 = vld [vmem:[%s4 + $0x20] sm:$0xff]
  %v330 = vld [vmem:[%s4 + $0x28] sm:$0xff]
  %v331 = vld [vmem:[%s4 + $0x30] sm:$0xff]
  %v332 = vld [vmem:[%s4 + $0x38] sm:$0xff]
  %v333 = vld [vmem:[%s4 + $0x40] sm:$0xff]
  %v334 = vld [vmem:[%s4 + $0x48] sm:$0xff]
  %v335 = vld [vmem:[%s4 + $0x50] sm:$0xff]
  %v336 = vld [vmem:[%s4 + $0x58] sm:$0xff]
  %v337 = vld [vmem:[%s4 + $0x60] sm:$0xff]
  %v338 = vld [vmem:[%s4 + $0x68] sm:$0xff]
  %v339 = vld [vmem:[%s4 + $0x70] sm:$0xff]
  %v340 = vld [vmem:[%s4 + $0x78] sm:$0xff]
  %341 = vmatpush.msra.mxu0 %v340
  %342 = vmatpush.msra.mxu0 %v339
  %343 = vmatpush.msra.mxu0 %v338
  %344 = vmatpush.msra.mxu0 %v337
  %345 = vmatpush.msra.mxu0 %v336
  %346 = vmatpush.msra.mxu0 %v335
  %347 = vmatpush.msra.mxu0 %v334
  %348 = vmatpush.msra.mxu0 %v333
  %349 = vmatpush.msra.mxu0 %v332
  %350 = vmatpush.msra.mxu0 %v331
  %351 = vmatpush.msra.mxu0 %v330
  %352 = vmatpush.msra.mxu0 %v329
  %353 = vmatpush.msra.mxu0 %v328
  %354 = vmatpush.msra.mxu0 %v327
  %355 = vmatpush.msra.mxu0 %v326
  %356 = vmatpush.msra.mxu0 %v325
  %357 = vmatmul.f32.gmra.mxu0 0.0
  %v358 = vpop.f32.mrf.mxu0
  %v359 = vadd.f32 0.0, %v358
  %360 = vdwg.mxu0
  %v361 = vld [vmem:[#allocation2] sm:$0xff]
  %v362 = vadd.f32 %v361, %v359
  %v363 = vmax.f32 %v362, 0.0
  %364 = vmatpush.msra.mxu0 %v340
  %365 = vmatpush.msra.mxu0 %v339
  %366 = vmatpush.msra.mxu0 %v338
  %367 = vmatpush.msra.mxu0 %v337
  %368 = vmatpush.msra.mxu0 %v336
  %369 = vmatpush.msra.mxu0 %v335
  %370 = vmatpush.msra.mxu0 %v334
  %371 = vmatpush.msra.mxu0 %v333
  %372 = vmatpush.msra.mxu0 %v332
  %373 = vmatpush.msra.mxu0 %v331
  %374 = vmatpush.msra.mxu0 %v330
  %375 = vmatpush.msra.mxu0 %v329
  %376 = vmatpush.msra.mxu0 %v328
  %377 = vmatpush.msra.mxu0 %v327
  %378 = vmatpush.msra.mxu0 %v326
  %379 = vmatpush.msra.mxu0 %v325
  %380 = vmatmul.f32.gmra.mxu0 %v363
  %v381 = vpop.f32.mrf.mxu0
  %v382 = vadd.f32 0.0, %v381
  %383 = vdwg.mxu0
  %v384 = vld [vmem:[%s90] sm:$0xff]
  %v385 = vadd.f32 %v384, %v382
  %v386 = vmax.f32 %v385, 0.0
  %387 = vmatpush.msra.mxu0 %v340
  %388 = vmatpush.msra.mxu0 %v339
  %389 = vmatpush.msra.mxu0 %v338
  %390 = vmatpush.msra.mxu0 %v337
  %391 = vmatpush.msra.mxu0 %v336
  %392 = vmatpush.msra.mxu0 %v335
  %393 = vmatpush.msra.mxu0 %v334
  %394 = vmatpush.msra.mxu0 %v333
  %395 = vmatpush.msra.mxu0 %v332
  %396 = vmatpush.msra.mxu0 %v331
  %397 = vmatpush.msra.mxu0 %v330
  %398 = vmatpush.msra.mxu0 %v329
  %399 = vmatpush.msra.mxu0 %v328
  %400 = vmatpush.msra.mxu0 %v327
  %401 = vmatpush.msra.mxu0 %v326
  %402 = vmatpush.msra.mxu0 %v325
  %403 = vmatmul.f32.gmra.mxu0 %v386
  %v404 = vpop.f32.mrf.mxu0
  %v405 = vadd.f32 0.0, %v404
  %406 = vdwg.mxu0
  %v407 = vld [vmem:[%s116] sm:$0xff]
  %v408 = vadd.f32 %v407, %v405
  %v409 = vmax.f32 %v408, 0.0
  %410 = vmatpush.msra.mxu0 %v340
  %411 = vmatpush.msra.mxu0 %v339
  %412 = vmatpush.msra.mxu0 %v338
  %413 = vmatpush.msra.mxu0 %v337
  %414 = vmatpush.msra.mxu0 %v336
  %415 = vmatpush.msra.mxu0 %v335
  %416 = vmatpush.msra.mxu0 %v334
  %417 = vmatpush.msra.mxu0 %v333
  %418 = vmatpush.msra.mxu0 %v332
  %419 = vmatpush.msra.mxu0 %v331
  %420 = vmatpush.msra.mxu0 %v330
  %421 = vmatpush.msra.mxu0 %v329
  %422 = vmatpush.msra.mxu0 %v328
  %423 = vmatpush.msra.mxu0 %v327
  %424 = vmatpush.msra.mxu0 %v326
  %425 = vmatpush.msra.mxu0 %v325
  %426 = vmatmul.f32.gmra.mxu0 %v409
  %v427 = vpop.f32.mrf.mxu0
  %v428 = vadd.f32 0.0, %v427
  %429 = vdwg.mxu0
  %v430 = vld [vmem:[%s142] sm:$0xff]
  %v431 = vadd.f32 %v430, %v428
  %v432 = vmax.f32 %v431, 0.0
  %433 = vmatpush.msra.mxu0 %v340
  %434 = vmatpush.msra.mxu0 %v339
  %435 = vmatpush.msra.mxu0 %v338
  %436 = vmatpush.msra.mxu0 %v337
  %437 = vmatpush.msra.mxu0 %v336
  %438 = vmatpush.msra.mxu0 %v335
  %439 = vmatpush.msra.mxu0 %v334
  %440 = vmatpush.msra.mxu0 %v333
  %441 = vmatpush.msra.mxu0 %v332
  %442 = vmatpush.msra.mxu0 %v331
  %443 = vmatpush.msra.mxu0 %v330
  %444 = vmatpush.msra.mxu0 %v329
  %445 = vmatpush.msra.mxu0 %v328
  %446 = vmatpush.msra.mxu0 %v327
  %447 = vmatpush.msra.mxu0 %v326
  %448 = vmatpush.msra.mxu0 %v325
  %449 = vmatmul.f32.gmra.mxu0 %v432
  %v450 = vpop.f32.mrf.mxu0
  %v451 = vadd.f32 0.0, %v450
  %452 = vdwg.mxu0
  %v453 = vld [vmem:[%s168] sm:$0xff]
  %v454 = vadd.f32 %v453, %v451
  %v455 = vmax.f32 %v454, 0.0
  %456 = vmatpush.msra.mxu0 %v340
  %457 = vmatpush.msra.mxu0 %v339
  %458 = vmatpush.msra.mxu0 %v338
  %459 = vmatpush.msra.mxu0 %v337
  %460 = vmatpush.msra.mxu0 %v336
  %461 = vmatpush.msra.mxu0 %v335
  %462 = vmatpush.msra.mxu0 %v334
  %463 = vmatpush.msra.mxu0 %v333
  %464 = vmatpush.msra.mxu0 %v332
  %465 = vmatpush.msra.mxu0 %v331
  %466 = vmatpush.msra.mxu0 %v330
  %467 = vmatpush.msra.mxu0 %v329
  %468 = vmatpush.msra.mxu0 %v328
  %469 = vmatpush.msra.mxu0 %v327
  %470 = vmatpush.msra.mxu0 %v326
  %471 = vmatpush.msra.mxu0 %v325
  %472 = vmatmul.f32.gmra.mxu0 %v455
  %v473 = vpop.f32.mrf.mxu0
  %v474 = vadd.f32 0.0, %v473
  %475 = vdwg.mxu0
  %v476 = vld [vmem:[%s194] sm:$0xff]
  %v477 = vadd.f32 %v476, %v474
  %v478 = vmax.f32 %v477, 0.0
  %479 = vmatpush.msra.mxu0 %v340
  %480 = vmatpush.msra.mxu0 %v339
  %481 = vmatpush.msra.mxu0 %v338
  %482 = vmatpush.msra.mxu0 %v337
  %483 = vmatpush.msra.mxu0 %v336
  %484 = vmatpush.msra.mxu0 %v335
  %485 = vmatpush.msra.mxu0 %v334
  %486 = vmatpush.msra.mxu0 %v333
  %487 = vmatpush.msra.mxu0 %v332
  %488 = vmatpush.msra.mxu0 %v331
  %489 = vmatpush.msra.mxu0 %v330
  %490 = vmatpush.msra.mxu0 %v329
  %491 = vmatpush.msra.mxu0 %v328
  %492 = vmatpush.msra.mxu0 %v327
  %493 = vmatpush.msra.mxu0 %v326
  %494 = vmatpush.msra.mxu0 %v325
  %495 = vmatmul.f32.gmra.mxu0 %v478
  %v496 = vpop.f32.mrf.mxu0
  %v497 = vadd.f32 0.0, %v496
  %498 = vdwg.mxu0
  %v499 = vld [vmem:[%s220] sm:$0xff]
  %v500 = vadd.f32 %v499, %v497
  %v501 = vmax.f32 %v500, 0.0
  %502 = vmatpush.msra.mxu0 %v340
  %503 = vmatpush.msra.mxu0 %v339
  %504 = vmatpush.msra.mxu0 %v338
  %505 = vmatpush.msra.mxu0 %v337
  %506 = vmatpush.msra.mxu0 %v336
  %507 = vmatpush.msra.mxu0 %v335
  %508 = vmatpush.msra.mxu0 %v334
  %509 = vmatpush.msra.mxu0 %v333
  %510 = vmatpush.msra.mxu0 %v332
  %511 = vmatpush.msra.mxu0 %v331
  %512 = vmatpush.msra.mxu0 %v330
  %513 = vmatpush.msra.mxu0 %v329
  %514 = vmatpush.msra.mxu0 %v328
  %515 = vmatpush.msra.mxu0 %v327
  %516 = vmatpush.msra.mxu0 %v326
  %517 = vmatpush.msra.mxu0 %v325
  %518 = vmatmul.f32.gmra.mxu0 %v501
  %v519 = vpop.f32.mrf.mxu0
  %v520 = vadd.f32 0.0, %v519
  %521 = vdwg.mxu0
  %v522 = vld [vmem:[%s246] sm:$0xff]
  %v523 = vadd.f32 %v522, %v520
  %v524 = vmax.f32 %v523, 0.0
  %v525 = vld [vmem:[%s5] sm:$0xff]
  %v526 = vld [vmem:[%s5 + $0x8] sm:$0xff]
  %v527 = vld [vmem:[%s5 + $0x10] sm:$0xff]
  %v528 = vld [vmem:[%s5 + $0x18] sm:$0xff]
  %v529 = vld [vmem:[%s5 + $0x20] sm:$0xff]
  %v530 = vld [vmem:[%s5 + $0x28] sm:$0xff]
  %v531 = vld [vmem:[%s5 + $0x30] sm:$0xff]
  %v532 = vld [vmem:[%s5 + $0x38] sm:$0xff]
  %v533 = vld [vmem:[%s5 + $0x40] sm:$0xff]
  %v534 = vld [vmem:[%s5 + $0x48] sm:$0xff]
  %v535 = vld [vmem:[%s5 + $0x50] sm:$0xff]
  %v536 = vld [vmem:[%s5 + $0x58] sm:$0xff]
  %v537 = vld [vmem:[%s5 + $0x60] sm:$0xff]
  %v538 = vld [vmem:[%s5 + $0x68] sm:$0xff]
  %v539 = vld [vmem:[%s5 + $0x70] sm:$0xff]
  %v540 = vld [vmem:[%s5 + $0x78] sm:$0xff]
  %v541 = vld [vmem:[%s6] sm:$0x1]
  %v543 = vperm.slane %v541, 0
  %545 = vmatpush.msra.mxu0 %v540
  %546 = vmatpush.msra.mxu0 %v539
  %547 = vmatpush.msra.mxu0 %v538
  %548 = vmatpush.msra.mxu0 %v537
  %549 = vmatpush.msra.mxu0 %v536
  %550 = vmatpush.msra.mxu0 %v535
  %551 = vmatpush.msra.mxu0 %v534
  %552 = vmatpush.msra.mxu0 %v533
  %553 = vmatpush.msra.mxu0 %v532
  %554 = vmatpush.msra.mxu0 %v531
  %555 = vmatpush.msra.mxu0 %v530
  %556 = vmatpush.msra.mxu0 %v529
  %557 = vmatpush.msra.mxu0 %v528
  %558 = vmatpush.msra.mxu0 %v527
  %559 = vmatpush.msra.mxu0 %v526
  %560 = vmatpush.msra.mxu0 %v525
  %561 = vmatmul.f32.gmra.mxu0 %v524
  %v562 = vpop.f32.mrf.mxu0
  %v563 = vadd.f32 %v543, %v562
  %564 = vdwg.mxu0
  %565 = vst [vmem:[%s7] sm:$0xff] %v563
  // Predicated region
  $region30: #{rnn_forward.1} parent=0 // pred_check
    _
  $region31: #{rnn_forward.1} parent=0 // pred_check_branch
    %567 = sbr.rel (0) target = $region33
  $region32: #{rnn_forward.1} parent=0 // pred_region
    _
  $region33: #{rnn_forward.1} parent=0 // pred_fallthru
    _
  // Predicated region
  $region34: #{rnn_forward.1} parent=0 // pred_check
    _
  $region35: #{rnn_forward.1} parent=0 // pred_check_branch
    %569 = sbr.rel (0) target = $region37
  $region36: #{rnn_forward.1} parent=0 // pred_region
    _
  $region37: #{rnn_forward.1} parent=0 // pred_fallthru
    _

</llo_original>
